<compile_context>
chip_gen: v6e
topology: v6e:2x2x1
jax: 0.10.0
libtpu: 0.0.40
codegen_flags: <defaults>
</compile_context>

<pallas_src>
import jax
import jax.numpy as jnp
from jax.experimental import pallas as pl
from jax.experimental.pallas import tpu as pltpu


_LANE = 128      # lane width: feature dims padded to multiples of this
_SUBLANE = 8     # sublane width: batch tile is a multiple of this


def _round_up(x, m):
    return ((x + m - 1) // m) * m


def _apply_activation(h, name):
    if name is None:
        return h
    name = name.lower()
    if name == "tanh":
        return jnp.tanh(h)          # EUP
    if name == "sigm":
        return jax.nn.sigmoid(h)    # EUP
    return jnp.maximum(h, 0.0)      # ReLU default, matches the torch module


def _make_mlp_kernel(activations):
    """activations: one entry per Linear layer (None => no activation)."""
    n_layers = len(activations)

    def mlp_kernel(*refs):
        x_ref = refs[0]
        p_refs = refs[1:1 + 2 * n_layers]      # (w0, b0, w1, b1, ...)
        o_ref = refs[1 + 2 * n_layers]
        h_scratch = refs[2 + 2 * n_layers]     # VMEM (tile_b, max_hidden) bf16

        h = x_ref[...]                          # bf16 (tile_b, d_in_pad)
        for i in range(n_layers):
            w = p_refs[2 * i][...]              # bf16 (din_pad, dout_pad)
            b = p_refs[2 * i + 1][...]          # f32  (1, dout_pad)
            acc = jnp.dot(h, w, preferred_element_type=jnp.float32) + b
            acc = _apply_activation(acc, activations[i])
            if i < n_layers - 1:
                w_out = acc.shape[1]            # static, multiple of 128
                h_scratch[:, :w_out] = acc.astype(h_scratch.dtype)
                h = h_scratch[:, :w_out]        # bf16 feed for next MXU pass
            else:
                o_ref[...] = acc.astype(o_ref.dtype)

    return mlp_kernel


def mlp_forward(x, params, activations, *, tile_b=256,
                compute_dtype=jnp.bfloat16):
    """x: (B, d_in) float. params: list of (W[(d_in,d_out)], b[(d_out,) or (1,d_out)]).
    activations: list (len == len(params)) of 'tanh'/'sigm'/'relu'/None."""
    B, d_in = x.shape
    n_layers = len(params)
    assert n_layers == len(activations)

    # --- pad feature dims to 128 lanes, cast matmul operands to bf16 -------
    d_in_pad = _round_up(d_in, _LANE)
    padded = []
    widths = []
    prev = d_in_pad
    for (w, b) in params:
        din, dout = w.shape
        din_p = _round_up(din, _LANE)
        dout_p = _round_up(dout, _LANE)
        assert din_p == prev, "layer sizes must chain"
        w_p = jnp.zeros((din_p, dout_p), compute_dtype)
        w_p = w_p.at[:din, :dout].set(w.astype(compute_dtype))
        b_row = jnp.asarray(b, jnp.float32).reshape(1, dout)
        b_p = jnp.zeros((1, dout_p), jnp.float32).at[:, :dout].set(b_row)
        padded.append((w_p, b_p))
        widths.append(dout_p)
        prev = dout_p
    d_out = params[-1][0].shape[1]
    d_out_pad = widths[-1]

    # --- batch tiling: large tile, multiple of 8 sublanes -------------------
    tile_b = min(tile_b, _round_up(B, _SUBLANE))
    tile_b = max(_SUBLANE, _round_up(tile_b, _SUBLANE))
    B_pad = _round_up(B, tile_b)

    x_p = jnp.zeros((B_pad, d_in_pad), compute_dtype)
    x_p = x_p.at[:B, :d_in].set(x.astype(compute_dtype))

    flat_params = []
    for w_p, b_p in padded:
        flat_params.append(w_p)
        flat_params.append(b_p)

    # x / out tiled over batch; every weight/bias fully resident each step.
    in_specs = [pl.BlockSpec((tile_b, d_in_pad), lambda i: (i, 0))]
    for p in flat_params:
        # bind ndim now (avoid late-binding bug)
        in_specs.append(pl.BlockSpec(p.shape, lambda i, _nd=p.ndim: (0,) * _nd))
    out_spec = pl.BlockSpec((tile_b, d_out_pad), lambda i: (i, 0))

    # Explicit VMEM staging buffer for the inter-layer activation.
    max_hidden = max(widths[:-1]) if n_layers > 1 else _LANE
    scratch_shapes = [pltpu.VMEM((tile_b, max_hidden), compute_dtype)]

    # --- VMEM budget (double-buffered BlockSpec inputs + scratch) -----------
    dsz = jnp.dtype(compute_dtype).itemsize
    vmem_bytes = 2 * tile_b * d_in_pad * dsz            # x, double-buffered
    vmem_bytes += 2 * tile_b * d_out_pad * 4            # f32 out, double-buffered
    for w_p, b_p in padded:
        vmem_bytes += 2 * (w_p.size * dsz + b_p.size * 4)
    vmem_bytes += tile_b * max_hidden * dsz             # scratch
    vmem_limit = int(min(max(vmem_bytes + (8 << 20), 16 << 20), 64 << 20))
    # TODO(synk): configs whose resident weights exceed ~64 MiB (v7x VMEM)
    # need weight streaming (pl.Buffered / manual DMA) instead of residency.

    kernel = _make_mlp_kernel(activations)

    out_padded = pl.pallas_call(
        kernel,
        out_shape=jax.ShapeDtypeStruct((B_pad, d_out_pad), jnp.float32),
        grid_spec=pltpu.PrefetchScalarGridSpec(
            num_scalar_prefetch=0,
            grid=(B_pad // tile_b,),
            in_specs=in_specs,
            out_specs=out_spec,
            scratch_shapes=scratch_shapes,
        ),
        compiler_params=pltpu.CompilerParams(
            dimension_semantics=("parallel",),
            vmem_limit_bytes=vmem_limit,
        ),
    )(x_p, *flat_params)

    return out_padded[:B, :d_out].astype(x.dtype)


def init_network_params(key, input_size, layers, output):
    """Mirror Network.__init__: Linear(input, l0)+act, ..., Linear(l[-1], out).

    Returns (params, activations); the final Linear has activation None.
    Weights are returned pre-transposed as (d_in, d_out); biases as (1, d_out),
    so the kernel's y = x @ W + b matches torch's x @ W.T + b.
    """
    sizes = [input_size] + [l["size"] for l in layers] + [output]
    acts = [l["function"] for l in layers] + [None]

    params = []
    for i in range(1, len(sizes)):
        d_in, d_out = sizes[i - 1], sizes[i]
        key, kw, kb = jax.random.split(key, 3)
        bound = 1.0 / (d_in ** 0.5)  # torch.nn.Linear default init range
        w = jax.random.uniform(kw, (d_in, d_out), jnp.float32, -bound, bound)
        b = jax.random.uniform(kb, (1, d_out), jnp.float32, -bound, bound)
        params.append((w, b))
    return params, acts


if __name__ == "__main__":
    # Network(input_size=32,
    #         layers=[{'size': 64, 'function': 'tanh'},
    #                 {'size': 64, 'function': 'relu'}],
    #         output=8)
    input_size = 32
    layer_cfg = [
        {"size": 64, "function": "tanh"},
        {"size": 64, "function": "relu"},
    ]
    output_size = 8
    batch = 256        # with tile_b=128 -> grid of 2 (both TCs busy on v7x)

    key = jax.random.PRNGKey(0)
    key, kx = jax.random.split(key)
    x = jax.random.normal(kx, (batch, input_size), jnp.float32)

    params, activations = init_network_params(
        key, input_size, layer_cfg, output_size
    )

    out = mlp_forward(x, params, activations, tile_b=128)
    out = jax.block_until_ready(out)
    assert out.shape == (batch, output_size)

    # Pure-JAX f32 reference; tolerance loosened for the bf16 MXU path.
    h = x
    for (w, b), act in zip(params, activations):
        h = h @ w + b
        h = _apply_activation(h, act)
    assert jnp.allclose(out, h, atol=5e-2, rtol=5e-2), \
        "kernel mismatch vs reference"

    print("KERNEL_OK")
</pallas_src>

<mosaic_0001>
module attributes {stable_mosaic.version = 11 : i64} {
  func.func @mlp_kernel(%arg0: i32, %arg1: memref<128x128xbf16, #tpu.memory_space<vmem>>, %arg2: memref<128x128xbf16, #tpu.memory_space<vmem>>, %arg3: memref<1x128xf32, #tpu.memory_space<vmem>>, %arg4: memref<128x128xbf16, #tpu.memory_space<vmem>>, %arg5: memref<1x128xf32, #tpu.memory_space<vmem>>, %arg6: memref<128x128xbf16, #tpu.memory_space<vmem>>, %arg7: memref<1x128xf32, #tpu.memory_space<vmem>>, %arg8: memref<128x128xf32, #tpu.memory_space<vmem>>, %arg9: memref<128x128xbf16, #tpu.memory_space<vmem>>) attributes {dimension_semantics = [#tpu.dimension_semantics<parallel>], iteration_bounds = array<i64: 2>, scalar_prefetch = 0 : i64, scratch_operands = 1 : i64, tpu.core_type = #tpu.core_type<tc>, window_params = [{transform_indices = @transform_0, window_bounds = array<i64: 128, 128>}, {pipeline_mode = #tpu.pipeline_mode<synchronous>, transform_indices = @transform_1, window_bounds = array<i64: 128, 128>}, {pipeline_mode = #tpu.pipeline_mode<synchronous>, transform_indices = @transform_2, window_bounds = array<i64: 1, 128>}, {pipeline_mode = #tpu.pipeline_mode<synchronous>, transform_indices = @transform_3, window_bounds = array<i64: 128, 128>}, {pipeline_mode = #tpu.pipeline_mode<synchronous>, transform_indices = @transform_4, window_bounds = array<i64: 1, 128>}, {pipeline_mode = #tpu.pipeline_mode<synchronous>, transform_indices = @transform_5, window_bounds = array<i64: 128, 128>}, {pipeline_mode = #tpu.pipeline_mode<synchronous>, transform_indices = @transform_6, window_bounds = array<i64: 1, 128>}, {transform_indices = @transform_7, window_bounds = array<i64: 128, 128>}]} {
    %c0 = arith.constant 0 : index
    %c0_0 = arith.constant 0 : index
    %0 = vector.load %arg1[%c0, %c0_0] : memref<128x128xbf16, #tpu.memory_space<vmem>>, vector<128x128xbf16>
    %c0_1 = arith.constant 0 : index
    %c0_2 = arith.constant 0 : index
    %1 = vector.load %arg2[%c0_1, %c0_2] : memref<128x128xbf16, #tpu.memory_space<vmem>>, vector<128x128xbf16>
    %c0_3 = arith.constant 0 : index
    %c0_4 = arith.constant 0 : index
    %2 = vector.load %arg3[%c0_3, %c0_4] : memref<1x128xf32, #tpu.memory_space<vmem>>, vector<1x128xf32>
    %cst = arith.constant dense<0.000000e+00> : vector<128x128xf32>
    %3 = tpu.matmul %0, %1, %cst {dimension_numbers = #tpu.dot_dimension_numbers<[1], [0], [0], [1], [0, 0, 1, 1], [], []>} : vector<128x128xbf16>, vector<128x128xbf16>, vector<128x128xf32> -> vector<128x128xf32>
    %4 = vector.broadcast %2 : vector<1x128xf32> to vector<128x128xf32>
    %5 = arith.addf %3, %4 : vector<128x128xf32>
    %6 = math.tanh %5 : vector<128x128xf32>
    %7 = arith.truncf %6 : vector<128x128xf32> to vector<128x128xbf16>
    %c0_5 = arith.constant 0 : index
    %c0_6 = arith.constant 0 : index
    %8 = vector.load %arg9[%c0_5, %c0_6] : memref<128x128xbf16, #tpu.memory_space<vmem>>, vector<128x128xbf16>
    tpu.vector_store %arg9[%c0_5, %c0_6], %7 {strides = array<i32>} : memref<128x128xbf16, #tpu.memory_space<vmem>>, vector<128x128xbf16>,
    %c0_7 = arith.constant 0 : index
    %c0_8 = arith.constant 0 : index
    %9 = vector.load %arg9[%c0_7, %c0_8] : memref<128x128xbf16, #tpu.memory_space<vmem>>, vector<128x128xbf16>
    %c0_9 = arith.constant 0 : index
    %c0_10 = arith.constant 0 : index
    %10 = vector.load %arg4[%c0_9, %c0_10] : memref<128x128xbf16, #tpu.memory_space<vmem>>, vector<128x128xbf16>
    %c0_11 = arith.constant 0 : index
    %c0_12 = arith.constant 0 : index
    %11 = vector.load %arg5[%c0_11, %c0_12] : memref<1x128xf32, #tpu.memory_space<vmem>>, vector<1x128xf32>
    %cst_13 = arith.constant dense<0.000000e+00> : vector<128x128xf32>
    %12 = tpu.matmul %9, %10, %cst_13 {dimension_numbers = #tpu.dot_dimension_numbers<[1], [0], [0], [1], [0, 0, 1, 1], [], []>} : vector<128x128xbf16>, vector<128x128xbf16>, vector<128x128xf32> -> vector<128x128xf32>
    %13 = vector.broadcast %11 : vector<1x128xf32> to vector<128x128xf32>
    %14 = arith.addf %12, %13 : vector<128x128xf32>
    %cst_14 = arith.constant 0.000000e+00 : f32
    %15 = vector.broadcast %cst_14 : f32 to vector<128x128xf32>
    %16 = arith.maximumf %14, %15 : vector<128x128xf32>
    %17 = arith.truncf %16 : vector<128x128xf32> to vector<128x128xbf16>
    %c0_15 = arith.constant 0 : index
    %c0_16 = arith.constant 0 : index
    %18 = vector.load %arg9[%c0_15, %c0_16] : memref<128x128xbf16, #tpu.memory_space<vmem>>, vector<128x128xbf16>
    tpu.vector_store %arg9[%c0_15, %c0_16], %17 {strides = array<i32>} : memref<128x128xbf16, #tpu.memory_space<vmem>>, vector<128x128xbf16>,
    %c0_17 = arith.constant 0 : index
    %c0_18 = arith.constant 0 : index
    %19 = vector.load %arg9[%c0_17, %c0_18] : memref<128x128xbf16, #tpu.memory_space<vmem>>, vector<128x128xbf16>
    %c0_19 = arith.constant 0 : index
    %c0_20 = arith.constant 0 : index
    %20 = vector.load %arg6[%c0_19, %c0_20] : memref<128x128xbf16, #tpu.memory_space<vmem>>, vector<128x128xbf16>
    %c0_21 = arith.constant 0 : index
    %c0_22 = arith.constant 0 : index
    %21 = vector.load %arg7[%c0_21, %c0_22] : memref<1x128xf32, #tpu.memory_space<vmem>>, vector<1x128xf32>
    %cst_23 = arith.constant dense<0.000000e+00> : vector<128x128xf32>
    %22 = tpu.matmul %19, %20, %cst_23 {dimension_numbers = #tpu.dot_dimension_numbers<[1], [0], [0], [1], [0, 0, 1, 1], [], []>} : vector<128x128xbf16>, vector<128x128xbf16>, vector<128x128xf32> -> vector<128x128xf32>
    %23 = vector.broadcast %21 : vector<1x128xf32> to vector<128x128xf32>
    %24 = arith.addf %22, %23 : vector<128x128xf32>
    %c0_24 = arith.constant 0 : index
    %c0_25 = arith.constant 0 : index
    %25 = vector.load %arg8[%c0_24, %c0_25] : memref<128x128xf32, #tpu.memory_space<vmem>>, vector<128x128xf32>
    tpu.vector_store %arg8[%c0_24, %c0_25], %24 {strides = array<i32>} : memref<128x128xf32, #tpu.memory_space<vmem>>, vector<128x128xf32>,
    return
  }
  func.func @transform_0(%arg0: i32) -> (i32, i32) {
    %c0_i32 = arith.constant 0 : i32
    %c0_i32_0 = arith.constant 0 : i32
    return %arg0, %c0_i32 : i32, i32
  }
  func.func @transform_1(%arg0: i32) -> (i32, i32) {
    %c0_i32 = arith.constant 0 : i32
    %c0_i32_0 = arith.constant 0 : i32
    %c0_i32_1 = arith.constant 0 : i32
    return %c0_i32, %c0_i32_0 : i32, i32
  }
  func.func @transform_2(%arg0: i32) -> (i32, i32) {
    %c0_i32 = arith.constant 0 : i32
    %c0_i32_0 = arith.constant 0 : i32
    %c0_i32_1 = arith.constant 0 : i32
    return %c0_i32, %c0_i32_0 : i32, i32
  }
  func.func @transform_3(%arg0: i32) -> (i32, i32) {
    %c0_i32 = arith.constant 0 : i32
    %c0_i32_0 = arith.constant 0 : i32
    %c0_i32_1 = arith.constant 0 : i32
    return %c0_i32, %c0_i32_0 : i32, i32
  }
  func.func @transform_4(%arg0: i32) -> (i32, i32) {
    %c0_i32 = arith.constant 0 : i32
    %c0_i32_0 = arith.constant 0 : i32
    %c0_i32_1 = arith.constant 0 : i32
    return %c0_i32, %c0_i32_0 : i32, i32
  }
  func.func @transform_5(%arg0: i32) -> (i32, i32) {
    %c0_i32 = arith.constant 0 : i32
    %c0_i32_0 = arith.constant 0 : i32
    %c0_i32_1 = arith.constant 0 : i32
    return %c0_i32, %c0_i32_0 : i32, i32
  }
  func.func @transform_6(%arg0: i32) -> (i32, i32) {
    %c0_i32 = arith.constant 0 : i32
    %c0_i32_0 = arith.constant 0 : i32
    %c0_i32_1 = arith.constant 0 : i32
    return %c0_i32, %c0_i32_0 : i32, i32
  }
  func.func @transform_7(%arg0: i32) -> (i32, i32) {
    %c0_i32 = arith.constant 0 : i32
    %c0_i32_0 = arith.constant 0 : i32
    return %arg0, %c0_i32 : i32, i32
  }
}

</mosaic_0001>

<llo_original>
// kernel: tpu_custom_call.1
$region0: #{tpu_custom_call.1}
  #allocation0 [shape = 'u32[]', space=smem, size = 0x4, offset = 0x4, fixed_abs, tag = 'smem constant byte address 0x4 - core index']
  #allocation1 [shape = 'u32[144,128]{1,0:T(1,128)}', space=vmem, size = 0x12000, scoped, tag = 'internal scratch']
  #allocation2 [shape = 'bf16[128,128]{1,0:T(8,128)(2,1)}', space=vmem, size = 0x8000, scoped, tag = 'scratch operand']
  %s0 = inlined_call_operand.hbm [shape: bf16[256,128], index: 0, kind: input, shape index: {}]
  %s1 = inlined_call_operand.hbm [shape: bf16[128,128], index: 1, kind: input, shape index: {}]
  %s2 = inlined_call_operand.vmem [shape: f32[1,128], index: 2, kind: input, shape index: {}]
  %s3 = inlined_call_operand.hbm [shape: bf16[128,128], index: 3, kind: input, shape index: {}]
  %s4 = inlined_call_operand.vmem [shape: f32[1,128], index: 4, kind: input, shape index: {}]
  %s5 = inlined_call_operand.hbm [shape: bf16[128,128], index: 5, kind: input, shape index: {}]
  %s6 = inlined_call_operand.vmem [shape: f32[1,128], index: 6, kind: input, shape index: {}]
  %s7 = inlined_call_operand.hbm [shape: f32[256,128], index: 7, kind: output, shape index: {}]
  %s8 = sld [smem:[#allocation0]]
  $region77: #{tpu_custom_call.1} parent=0
    _
  %s10 = ssub.s32 1, %s8
  %s11 = scalar_select 0, %s10, %s8
  $region1: #{tpu_custom_call.1} parent=0
    #allocation3 [shape = 'u8[65536]{0}', space=vmem, size = 0x10000, scoped, tag = 'input window, operand 0']
    #allocation4 [shape = 's32[2]{0}', space=sflag, size = 0x8, scoped, tag = 'scoped memory for tpu_custom_call.1']
    #allocation5 [shape = 's32[2]{0}', space=sflag, size = 0x8, scoped, tag = 'scoped memory for tpu_custom_call.1']
    #allocation6 [shape = 'u8[32768]{0}', space=vmem, size = 0x8000, scoped, tag = 'input window, operand 1, single buffered']
    #allocation7 [shape = 's32[1]{0}', space=sflag, size = 0x4, scoped, tag = 'scoped memory for tpu_custom_call.1']
    #allocation8 [shape = 'u8[32768]{0}', space=vmem, size = 0x8000, scoped, tag = 'input window, operand 3, single buffered']
    #allocation9 [shape = 'u8[32768]{0}', space=vmem, size = 0x8000, scoped, tag = 'input window, operand 5, single buffered']
    #allocation10 [shape = 's32[1]{0}', space=sflag, size = 0x4, scoped, tag = 'scoped memory for tpu_custom_call.1']
    #allocation11 [shape = 'u8[131072]{0}', space=vmem, size = 0x20000, scoped, tag = 'output window, operand 0']
    %12 = vsyncpa [#allocation4], 0
    %s13 = scalar_lea.sflag [#allocation4], 1
    %14 = vsyncpa %s13, 0
    %15 = vsyncpa [#allocation7], 0
    %16 = vsyncpa [#allocation10], 0
    %17 = vsyncpa [#allocation5], 0
    %s18 = scalar_lea.sflag [#allocation5], 1
    %19 = vsyncpa %s18, 0
    loop: start=0, step=1, limit=4
    $region2: #{tpu_custom_call.1} parent=1 // loop_pre_header
      _
    $region3: #{tpu_custom_call.1} parent=1 // loop_header
      %s21 = sphi 0, %s25
      %p22 = scmp.ge.s32.totalorder %s21, 4
      %s31 = sphi 0, %s33
      %s34 = sphi 0, %s31
      %s35 = sphi 0, %s34
      %s51 = sphi 0, %s35
      %s55 = sphi 0, %s55
      %s57 = sphi 0, %s55
      %s58 = sphi 0, %s57
      %s72 = sphi 0, %s58
      %s76 = sphi 0, %s76
      %s78 = sphi 0, %s76
      %s79 = sphi 0, %s78
      %s93 = sphi 0, %s79
      %s97 = sphi 0, %s97
      %s99 = sphi 0, %s97
      %s100 = sphi 0, %s99
      %s114 = sphi 0, %s100
      %s118 = sphi 0, %s118
      %s120 = sphi 0, %s118
      %s121 = sphi 0, %s120
      %s135 = sphi 0, %s121
      %s139 = sphi 0, %s139
      %s141 = sphi 0, %s139
      %s142 = sphi 0, %s141
      %s156 = sphi 0, %s142
      %s160 = sphi 0, %s160
      %s162 = sphi 0, %s160
      %s163 = sphi 0, %s162
      %s177 = sphi 0, %s163
      %s183 = sphi 0, %s185
      %s186 = sphi 0, %s183
      %s187 = sphi 0, %s186
      %s203 = sphi 0, %s187
    $region4: #{tpu_custom_call.1} parent=1 // loop_header_branch
      %24 = sbr.rel (%p22) target = $region8
    $region5: #{tpu_custom_call.1} parent=1 // loop_body
      %s26 = ssub.s32 %s21, 1
      %s27 = ssub.s32 %s21, 2
      %s28 = sadd.s32 %s21, 1
      %s29 = ssub.s32 %s21, %s28
      %p30 = scmp.eq.s32.totalorder %s29, 0
      %s32 = sadd.s32 %s31, 1
      %s33 = scalar_select %p30, %s31, %s32
      %p36 = pneg %p30
      %p37 = scmp.eq.s32.totalorder %s21, 1
      %p38 = por %p36, %p37
      %p39 = scmp.ne.s32.totalorder %s31, %s34
      %p40 = scmp.eq.s32.totalorder %s21, 0
      %p41 = por %p39, %p40
      %p42 = scmp.ne.s32.totalorder %s31, %s34
      %p43 = scmp.eq.s32.totalorder %s26, 1
      %p44 = por %p42, %p43
      %p45 = scmp.ne.s32.totalorder %s34, %s35
      %p46 = scmp.eq.s32.totalorder %s26, 0
      %p47 = por %p45, %p46
      %p48 = scmp.ne.s32.totalorder %s34, %s35
      %p49 = scmp.eq.s32.totalorder %s27, 1
      %p50 = por %p48, %p49
      %p52 = scmp.ne.s32.totalorder %s35, %s51
      %p53 = scmp.eq.s32.totalorder %s27, 0
      %p54 = por %p52, %p53
      %s56 = sadd.s32 %s55, 1
      %p59 = scmp.eq.s32.totalorder %s21, 1
      %p60 = scmp.ne.s32.totalorder %s55, %s57
      %p61 = scmp.eq.s32.totalorder %s21, 0
      %p62 = por %p60, %p61
      %p63 = scmp.ne.s32.totalorder %s55, %s57
      %p64 = scmp.eq.s32.totalorder %s26, 1
      %p65 = por %p63, %p64
      %p66 = scmp.ne.s32.totalorder %s57, %s58
      %p67 = scmp.eq.s32.totalorder %s26, 0
      %p68 = por %p66, %p67
      %p69 = scmp.ne.s32.totalorder %s57, %s58
      %p70 = scmp.eq.s32.totalorder %s27, 1
      %p71 = por %p69, %p70
      %p73 = scmp.ne.s32.totalorder %s58, %s72
      %p74 = scmp.eq.s32.totalorder %s27, 0
      %p75 = por %p73, %p74
      %s77 = sadd.s32 %s76, 1
      %p80 = scmp.eq.s32.totalorder %s21, 1
      %p81 = scmp.ne.s32.totalorder %s76, %s78
      %p82 = scmp.eq.s32.totalorder %s21, 0
      %p83 = por %p81, %p82
      %p84 = scmp.ne.s32.totalorder %s76, %s78
      %p85 = scmp.eq.s32.totalorder %s26, 1
      %p86 = por %p84, %p85
      %p87 = scmp.ne.s32.totalorder %s78, %s79
      %p88 = scmp.eq.s32.totalorder %s26, 0
      %p89 = por %p87, %p88
      %p90 = scmp.ne.s32.totalorder %s78, %s79
      %p91 = scmp.eq.s32.totalorder %s27, 1
      %p92 = por %p90, %p91
      %p94 = scmp.ne.s32.totalorder %s79, %s93
      %p95 = scmp.eq.s32.totalorder %s27, 0
      %p96 = por %p94, %p95
      %s98 = sadd.s32 %s97, 1
      %p101 = scmp.eq.s32.totalorder %s21, 1
      %p102 = scmp.ne.s32.totalorder %s97, %s99
      %p103 = scmp.eq.s32.totalorder %s21, 0
      %p104 = por %p102, %p103
      %p105 = scmp.ne.s32.totalorder %s97, %s99
      %p106 = scmp.eq.s32.totalorder %s26, 1
      %p107 = por %p105, %p106
      %p108 = scmp.ne.s32.totalorder %s99, %s100
      %p109 = scmp.eq.s32.totalorder %s26, 0
      %p110 = por %p108, %p109
      %p111 = scmp.ne.s32.totalorder %s99, %s100
      %p112 = scmp.eq.s32.totalorder %s27, 1
      %p113 = por %p111, %p112
      %p115 = scmp.ne.s32.totalorder %s100, %s114
      %p116 = scmp.eq.s32.totalorder %s27, 0
      %p117 = por %p115, %p116
      %s119 = sadd.s32 %s118, 1
      %p122 = scmp.eq.s32.totalorder %s21, 1
      %p123 = scmp.ne.s32.totalorder %s118, %s120
      %p124 = scmp.eq.s32.totalorder %s21, 0
      %p125 = por %p123, %p124
      %p126 = scmp.ne.s32.totalorder %s118, %s120
      %p127 = scmp.eq.s32.totalorder %s26, 1
      %p128 = por %p126, %p127
      %p129 = scmp.ne.s32.totalorder %s120, %s121
      %p130 = scmp.eq.s32.totalorder %s26, 0
      %p131 = por %p129, %p130
      %p132 = scmp.ne.s32.totalorder %s120, %s121
      %p133 = scmp.eq.s32.totalorder %s27, 1
      %p134 = por %p132, %p133
      %p136 = scmp.ne.s32.totalorder %s121, %s135
      %p137 = scmp.eq.s32.totalorder %s27, 0
      %p138 = por %p136, %p137
      %s140 = sadd.s32 %s139, 1
      %p143 = scmp.eq.s32.totalorder %s21, 1
      %p144 = scmp.ne.s32.totalorder %s139, %s141
      %p145 = scmp.eq.s32.totalorder %s21, 0
      %p146 = por %p144, %p145
      %p147 = scmp.ne.s32.totalorder %s139, %s141
      %p148 = scmp.eq.s32.totalorder %s26, 1
      %p149 = por %p147, %p148
      %p150 = scmp.ne.s32.totalorder %s141, %s142
      %p151 = scmp.eq.s32.totalorder %s26, 0
      %p152 = por %p150, %p151
      %p153 = scmp.ne.s32.totalorder %s141, %s142
      %p154 = scmp.eq.s32.totalorder %s27, 1
      %p155 = por %p153, %p154
      %p157 = scmp.ne.s32.totalorder %s142, %s156
      %p158 = scmp.eq.s32.totalorder %s27, 0
      %p159 = por %p157, %p158
      %s161 = sadd.s32 %s160, 1
      %p164 = scmp.eq.s32.totalorder %s21, 1
      %p165 = scmp.ne.s32.totalorder %s160, %s162
      %p166 = scmp.eq.s32.totalorder %s21, 0
      %p167 = por %p165, %p166
      %p168 = scmp.ne.s32.totalorder %s160, %s162
      %p169 = scmp.eq.s32.totalorder %s26, 1
      %p170 = por %p168, %p169
      %p171 = scmp.ne.s32.totalorder %s162, %s163
      %p172 = scmp.eq.s32.totalorder %s26, 0
      %p173 = por %p171, %p172
      %p174 = scmp.ne.s32.totalorder %s162, %s163
      %p175 = scmp.eq.s32.totalorder %s27, 1
      %p176 = por %p174, %p175
      %p178 = scmp.ne.s32.totalorder %s163, %s177
      %p179 = scmp.eq.s32.totalorder %s27, 0
      %p180 = por %p178, %p179
      %s181 = ssub.s32 %s21, %s28
      %p182 = scmp.eq.s32.totalorder %s181, 0
      %s184 = sadd.s32 %s183, 1
      %s185 = scalar_select %p182, %s183, %s184
      %p188 = pneg %p182
      %p189 = scmp.eq.s32.totalorder %s21, 1
      %p190 = por %p188, %p189
      %p191 = scmp.ne.s32.totalorder %s183, %s186
      %p192 = scmp.eq.s32.totalorder %s21, 0
      %p193 = por %p191, %p192
      %p194 = scmp.ne.s32.totalorder %s183, %s186
      %p195 = scmp.eq.s32.totalorder %s26, 1
      %p196 = por %p194, %p195
      %p197 = scmp.ne.s32.totalorder %s186, %s187
      %p198 = scmp.eq.s32.totalorder %s26, 0
      %p199 = por %p197, %p198
      %p200 = scmp.ne.s32.totalorder %s186, %s187
      %p201 = scmp.eq.s32.totalorder %s27, 1
      %p202 = por %p200, %p201
      %p204 = scmp.ne.s32.totalorder %s187, %s203
      %p205 = scmp.eq.s32.totalorder %s27, 0
      %p206 = por %p204, %p205
      %p207 = scmp.le.s32.totalorder 1, %s21
      %p208 = scmp.lt.s32.totalorder %s21, 3
      %p209 = pnand %p207, %p208
      %p210 = pneg %p209
      // Predicated region
      $region9: #{tpu_custom_call.1} parent=5 // pred_check
        _
      $region10: #{tpu_custom_call.1} parent=5 // pred_check_branch
        %212 = sbr.rel (%p209) target = $region12
      $region11: #{tpu_custom_call.1} parent=5 // pred_region
        %s213 = ssub.s32 %s21, 1
        // Predicated region
        $region13: #{tpu_custom_call.1} parent=11 // pred_check
          %p214 = pneg %p68
        $region14: #{tpu_custom_call.1} parent=11 // pred_check_branch
          %216 = sbr.rel (%p214) target = $region16
        $region15: #{tpu_custom_call.1} parent=11 // pred_region
          %s218 = ssub.s32 1024, 1024
          %219 = vsyncadd [#allocation7], %s218
          %s220 = sshll.u32 [#allocation6], 4
          %s221 = int_to_ptr.vmem [resolvable:$true] %s220
          %226 = dma.hbm_to_vmem [thread:$0]  %s1, 1024, %s221, [#allocation7], 64, 64, 4
        $region16: #{tpu_custom_call.1} parent=11 // pred_fallthru
          _
        // Predicated region
        $region17: #{tpu_custom_call.1} parent=11 // pred_check
          %p227 = pneg %p89
        $region18: #{tpu_custom_call.1} parent=11 // pred_check_branch
          %229 = sbr.rel (%p227) target = $region20
        $region19: #{tpu_custom_call.1} parent=11 // pred_region
          _
        $region20: #{tpu_custom_call.1} parent=11 // pred_fallthru
          _
        // Predicated region
        $region21: #{tpu_custom_call.1} parent=11 // pred_check
          %p230 = pneg %p110
        $region22: #{tpu_custom_call.1} parent=11 // pred_check_branch
          %232 = sbr.rel (%p230) target = $region24
        $region23: #{tpu_custom_call.1} parent=11 // pred_region
          %s234 = ssub.s32 1024, 1024
          %235 = vsyncadd [#allocation7], %s234
          %s236 = sshll.u32 [#allocation8], 4
          %s237 = int_to_ptr.vmem [resolvable:$true] %s236
          %242 = dma.hbm_to_vmem [thread:$0]  %s3, 1024, %s237, [#allocation7], 64, 64, 4
        $region24: #{tpu_custom_call.1} parent=11 // pred_fallthru
          _
        // Predicated region
        $region25: #{tpu_custom_call.1} parent=11 // pred_check
          %p243 = pneg %p131
        $region26: #{tpu_custom_call.1} parent=11 // pred_check_branch
          %245 = sbr.rel (%p243) target = $region28
        $region27: #{tpu_custom_call.1} parent=11 // pred_region
          _
        $region28: #{tpu_custom_call.1} parent=11 // pred_fallthru
          _
        // Predicated region
        $region29: #{tpu_custom_call.1} parent=11 // pred_check
          %p246 = pneg %p152
        $region30: #{tpu_custom_call.1} parent=11 // pred_check_branch
          %248 = sbr.rel (%p246) target = $region32
        $region31: #{tpu_custom_call.1} parent=11 // pred_region
          %s250 = ssub.s32 1024, 1024
          %251 = vsyncadd [#allocation10], %s250
          %s252 = sshll.u32 [#allocation9], 4
          %s253 = int_to_ptr.vmem [resolvable:$true] %s252
          %258 = dma.hbm_to_vmem [thread:$0]  %s5, 1024, %s253, [#allocation10], 64, 64, 4
        $region32: #{tpu_custom_call.1} parent=11 // pred_fallthru
          _
        // Predicated region
        $region33: #{tpu_custom_call.1} parent=11 // pred_check
          %p259 = pneg %p173
        $region34: #{tpu_custom_call.1} parent=11 // pred_check_branch
          %261 = sbr.rel (%p259) target = $region36
        $region35: #{tpu_custom_call.1} parent=11 // pred_region
          _
        $region36: #{tpu_custom_call.1} parent=11 // pred_fallthru
          _
      $region12: #{tpu_custom_call.1} parent=5 // pred_fallthru
        _
      %p262 = scmp.lt.s32.totalorder %s21, 2
      // Predicated region
      $region37: #{tpu_custom_call.1} parent=5 // pred_check
        %p263 = pneg %p262
      $region38: #{tpu_custom_call.1} parent=5 // pred_check_branch
        %265 = sbr.rel (%p263) target = $region40
      $region39: #{tpu_custom_call.1} parent=5 // pred_region
        // Predicated region
        $region41: #{tpu_custom_call.1} parent=39 // pred_check
          %p266 = pneg %p41
        $region42: #{tpu_custom_call.1} parent=39 // pred_check_branch
          %268 = sbr.rel (%p266) target = $region44
        $region43: #{tpu_custom_call.1} parent=39 // pred_region
          %s269 = sand.u32 %s31, 1
          %s270 = scalar_lea.sflag [#allocation4], %s269
          %s271 = sand.u32 %s31, 1
          %s272 = smul.addr %s271, 64
          %s273 = scalar_lea.vmem [#allocation3], %s272
          %s274 = smul.u32 16, %s21
          %s276 = ssub.s32 1024, 1024
          %277 = vsyncadd %s270, %s276
          %s278 = smul.addr %s274, 64
          %s279 = scalar_lea.hbm %s0, %s278
          %s280 = sshll.u32 %s273, 4
          %s281 = int_to_ptr.vmem [resolvable:$true] %s280
          %286 = dma.hbm_to_vmem [thread:$0]  %s279, 1024, %s281, %s270, 64, 64, 4
        $region44: #{tpu_custom_call.1} parent=39 // pred_fallthru
          _
      $region40: #{tpu_custom_call.1} parent=5 // pred_fallthru
        _
      %p287 = scmp.le.s32.totalorder 1, %s21
      %p288 = scmp.lt.s32.totalorder %s21, 3
      %p289 = pnand %p287, %p288
      %p290 = pneg %p289
      // Predicated region
      $region45: #{tpu_custom_call.1} parent=5 // pred_check
        _
      $region46: #{tpu_custom_call.1} parent=5 // pred_check_branch
        %292 = sbr.rel (%p289) target = $region48
      $region47: #{tpu_custom_call.1} parent=5 // pred_region
        %s293 = ssub.s32 %s21, 1
        %s294 = sand.u32 %s34, 1
        %s295 = scalar_lea.sflag [#allocation4], %s294
        %s296 = sand.u32 %s34, 1
        %s297 = smul.addr %s296, 64
        %s298 = scalar_lea.vmem [#allocation3], %s297
        // Predicated region
        $region49: #{tpu_custom_call.1} parent=47 // pred_check
          %p299 = pneg %p47
        $region50: #{tpu_custom_call.1} parent=47 // pred_check_branch
          %301 = sbr.rel (%p299) target = $region52
        $region51: #{tpu_custom_call.1} parent=47 // pred_region
          %302 = dma.done %s295, 1024
        $region52: #{tpu_custom_call.1} parent=47 // pred_fallthru
          _
        // Predicated region
        $region53: #{tpu_custom_call.1} parent=47 // pred_check
          %p303 = pneg %p68
        $region54: #{tpu_custom_call.1} parent=47 // pred_check_branch
          %305 = sbr.rel (%p303) target = $region56
        $region55: #{tpu_custom_call.1} parent=47 // pred_region
          %306 = dma.done [#allocation7], 1024
        $region56: #{tpu_custom_call.1} parent=47 // pred_fallthru
          _
        // Predicated region
        $region57: #{tpu_custom_call.1} parent=47 // pred_check
          %p307 = pneg %p110
        $region58: #{tpu_custom_call.1} parent=47 // pred_check_branch
          %309 = sbr.rel (%p307) target = $region60
        $region59: #{tpu_custom_call.1} parent=47 // pred_region
          %310 = dma.done [#allocation7], 1024
        $region60: #{tpu_custom_call.1} parent=47 // pred_fallthru
          _
        // Predicated region
        $region61: #{tpu_custom_call.1} parent=47 // pred_check
          %p311 = pneg %p152
        $region62: #{tpu_custom_call.1} parent=47 // pred_check_branch
          %313 = sbr.rel (%p311) target = $region64
        $region63: #{tpu_custom_call.1} parent=47 // pred_region
          %314 = dma.done [#allocation10], 1024
        $region64: #{tpu_custom_call.1} parent=47 // pred_fallthru
          _
        %s315 = sand.u32 %s34, 1
        %s316 = scalar_lea.sflag [#allocation4], %s315
        %s317 = sand.u32 %s34, 1
        %s318 = smul.addr %s317, 64
        %s319 = scalar_lea.vmem [#allocation3], %s318
        %p320 = pneg %p47
        %p321 = pneg %p44
        %p322 = pneg %p68
        %p323 = pneg %p65
        %p324 = pneg %p89
        %p325 = pneg %p86
        %p326 = pneg %p110
        %p327 = pneg %p107
        %p328 = pneg %p131
        %p329 = pneg %p128
        %p330 = pneg %p152
        %p331 = pneg %p149
        %p332 = pneg %p173
        %p333 = pneg %p170
        %p334 = pneg %p199
        %p335 = pneg %p196
        %s336 = sand.u32 %s186, 1
        %s337 = scalar_lea.sflag [#allocation5], %s336
        %s338 = sand.u32 %s186, 1
        %s339 = smul.addr %s338, 128
        %s340 = scalar_lea.vmem [#allocation11], %s339
        %s341 = smul.u32 16, %s26
        %s342 = smul.u32 16, %s26
        %v344 = vld [vmem:[%s298] sm:$0xf]
        %v345 = vld [vmem:[%s298 + $0x4] sm:$0xf]
        %v346 = vld [vmem:[%s298 + $0x8] sm:$0xf]
        %v347 = vld [vmem:[%s298 + $0xc] sm:$0xf]
        %v348 = vld [vmem:[%s298 + $0x10] sm:$0xf]
        %v349 = vld [vmem:[%s298 + $0x14] sm:$0xf]
        %v350 = vld [vmem:[%s298 + $0x18] sm:$0xf]
        %v351 = vld [vmem:[%s298 + $0x1c] sm:$0xf]
        %v352 = vld [vmem:[%s298 + $0x20] sm:$0xf]
        %v353 = vld [vmem:[%s298 + $0x24] sm:$0xf]
        %v354 = vld [vmem:[%s298 + $0x28] sm:$0xf]
        %v355 = vld [vmem:[%s298 + $0x2c] sm:$0xf]
        %v356 = vld [vmem:[%s298 + $0x30] sm:$0xf]
        %v357 = vld [vmem:[%s298 + $0x34] sm:$0xf]
        %v358 = vld [vmem:[%s298 + $0x38] sm:$0xf]
        %v359 = vld [vmem:[%s298 + $0x3c] sm:$0xf]
        %v360 = vld [vmem:[#allocation6] sm:$0xf]
        %v361 = vld [vmem:[#allocation6 + $0x4] sm:$0xf]
        %v362 = vld [vmem:[#allocation6 + $0x8] sm:$0xf]
        %v363 = vld [vmem:[#allocation6 + $0xc] sm:$0xf]
        %v364 = vld [vmem:[#allocation6 + $0x10] sm:$0xf]
        %v365 = vld [vmem:[#allocation6 + $0x14] sm:$0xf]
        %v366 = vld [vmem:[#allocation6 + $0x18] sm:$0xf]
        %v367 = vld [vmem:[#allocation6 + $0x1c] sm:$0xf]
        %v368 = vld [vmem:[#allocation6 + $0x20] sm:$0xf]
        %v369 = vld [vmem:[#allocation6 + $0x24] sm:$0xf]
        %v370 = vld [vmem:[#allocation6 + $0x28] sm:$0xf]
        %v371 = vld [vmem:[#allocation6 + $0x2c] sm:$0xf]
        %v372 = vld [vmem:[#allocation6 + $0x30] sm:$0xf]
        %v373 = vld [vmem:[#allocation6 + $0x34] sm:$0xf]
        %v374 = vld [vmem:[#allocation6 + $0x38] sm:$0xf]
        %v375 = vld [vmem:[#allocation6 + $0x3c] sm:$0xf]
        %v376 = vld [vmem:[%s2] sm:$0x1]
        %v378 = vlaneseq
        %v379 = vshrl.u32 %v378, 7
        %v380 = vsub.s32 0, %v379
        %v381 = vrot.slane %v376, %v380
        %v399 = vunpack.c.l.b16 %v344
        %v400 = vunpack.c.l.b16 %v345
        %v401 = vunpack.c.l.b16 %v346
        %v402 = vunpack.c.l.b16 %v347
        %v403 = vunpack.c.l.b16 %v348
        %v404 = vunpack.c.l.b16 %v349
        %v405 = vunpack.c.l.b16 %v350
        %v406 = vunpack.c.l.b16 %v351
        %v407 = vunpack.c.l.b16 %v352
        %v408 = vunpack.c.l.b16 %v353
        %v409 = vunpack.c.l.b16 %v354
        %v410 = vunpack.c.l.b16 %v355
        %v411 = vunpack.c.l.b16 %v356
        %v412 = vunpack.c.l.b16 %v357
        %v413 = vunpack.c.l.b16 %v358
        %v414 = vunpack.c.l.b16 %v359
        %v415 = vpack.c.b16 %v400, %v399
        %v416 = vpack.c.b16 %v402, %v401
        %v417 = vpack.c.b16 %v404, %v403
        %v418 = vpack.c.b16 %v406, %v405
        %v419 = vpack.c.b16 %v408, %v407
        %v420 = vpack.c.b16 %v410, %v409
        %v421 = vpack.c.b16 %v412, %v411
        %v422 = vpack.c.b16 %v414, %v413
        %v447 = vunpack.c.l.b16 %v360
        %v448 = vunpack.c.l.b16 %v361
        %v449 = vunpack.c.l.b16 %v362
        %v450 = vunpack.c.l.b16 %v363
        %v451 = vunpack.c.l.b16 %v364
        %v452 = vunpack.c.l.b16 %v365
        %v453 = vunpack.c.l.b16 %v366
        %v454 = vunpack.c.l.b16 %v367
        %v455 = vunpack.c.l.b16 %v368
        %v456 = vunpack.c.l.b16 %v369
        %v457 = vunpack.c.l.b16 %v370
        %v458 = vunpack.c.l.b16 %v371
        %v459 = vunpack.c.l.b16 %v372
        %v460 = vunpack.c.l.b16 %v373
        %v461 = vunpack.c.l.b16 %v374
        %v462 = vunpack.c.l.b16 %v375
        %v463 = vpack.c.b16 %v448, %v447
        %v464 = vpack.c.b16 %v450, %v449
        %v465 = vpack.c.b16 %v452, %v451
        %v466 = vpack.c.b16 %v454, %v453
        %v467 = vpack.c.b16 %v456, %v455
        %v468 = vpack.c.b16 %v458, %v457
        %v469 = vpack.c.b16 %v460, %v459
        %v470 = vpack.c.b16 %v462, %v461
        %479 = vmatprep.subr.bf16.mxu0 0
        %480 = vmatpush1.bf16.msra.mxu0 %v470
        %481 = vmatprep.subr.bf16.mxu0 0
        %482 = vmatpush1.bf16.msra.mxu0 %v469
        %483 = vmatprep.subr.bf16.mxu0 0
        %484 = vmatpush1.bf16.msra.mxu0 %v468
        %485 = vmatprep.subr.bf16.mxu0 0
        %486 = vmatpush1.bf16.msra.mxu0 %v467
        %487 = vmatprep.subr.bf16.mxu0 0
        %488 = vmatpush1.bf16.msra.mxu0 %v466
        %489 = vmatprep.subr.bf16.mxu0 0
        %490 = vmatpush1.bf16.msra.mxu0 %v465
        %491 = vmatprep.subr.bf16.mxu0 0
        %492 = vmatpush1.bf16.msra.mxu0 %v464
        %493 = vmatprep.subr.bf16.mxu0 0
        %494 = vmatpush1.bf16.msra.mxu0 %v463
        %495 = vmatprep.subr.bf16.mxu0 0
        %496 = vmatpush2.bf16.msra.mxu0 0
        %497 = vmatprep.subr.bf16.mxu0 0
        %498 = vmatpush2.bf16.msra.mxu0 0
        %499 = vmatprep.subr.bf16.mxu0 0
        %500 = vmatpush2.bf16.msra.mxu0 0
        %501 = vmatprep.subr.bf16.mxu0 0
        %502 = vmatpush2.bf16.msra.mxu0 0
        %503 = vmatprep.subr.bf16.mxu0 0
        %504 = vmatpush2.bf16.msra.mxu0 0
        %505 = vmatprep.subr.bf16.mxu0 0
        %506 = vmatpush2.bf16.msra.mxu0 0
        %507 = vmatprep.subr.bf16.mxu0 0
        %508 = vmatpush2.bf16.msra.mxu0 0
        %509 = vmatprep.subr.bf16.mxu0 0
        %510 = vmatpush2.bf16.msra.mxu0 0
        %511 = vmatprep.mubr.bf16.mxu0 0
        %512 = vmatmul.mubr.bf16.gmra.mxu0 %v415
        %v513 = vpop.f32.mrf.mxu0
        %v514 = vadd.f32 %v381, %v513
        %v515 = vpop.f32.mrf.mxu0
        %v516 = vpop.f32.mrf.mxu0
        %v517 = vadd.f32 %v381, %v516
        %v518 = vpop.f32.mrf.mxu0
        %519 = vmatprep.mubr.bf16.mxu0 0
        %520 = vmatmul.mubr.bf16.gmra.mxu0 %v416
        %v521 = vpop.f32.mrf.mxu0
        %v522 = vadd.f32 %v381, %v521
        %v523 = vpop.f32.mrf.mxu0
        %v524 = vpop.f32.mrf.mxu0
        %v525 = vadd.f32 %v381, %v524
        %v526 = vpop.f32.mrf.mxu0
        %527 = vmatprep.mubr.bf16.mxu0 0
        %528 = vmatmul.mubr.bf16.gmra.mxu0 %v417
        %v529 = vpop.f32.mrf.mxu0
        %v530 = vadd.f32 %v381, %v529
        %v531 = vpop.f32.mrf.mxu0
        %v532 = vpop.f32.mrf.mxu0
        %v533 = vadd.f32 %v381, %v532
        %v534 = vpop.f32.mrf.mxu0
        %535 = vmatprep.mubr.bf16.mxu0 0
        %536 = vmatmul.mubr.bf16.gmra.mxu0 %v418
        %v537 = vpop.f32.mrf.mxu0
        %v538 = vadd.f32 %v381, %v537
        %v539 = vpop.f32.mrf.mxu0
        %v540 = vpop.f32.mrf.mxu0
        %v541 = vadd.f32 %v381, %v540
        %v542 = vpop.f32.mrf.mxu0
        %543 = vmatprep.mubr.bf16.mxu0 0
        %544 = vmatmul.mubr.bf16.gmra.mxu0 %v419
        %v545 = vpop.f32.mrf.mxu0
        %v546 = vadd.f32 %v381, %v545
        %v547 = vpop.f32.mrf.mxu0
        %v548 = vpop.f32.mrf.mxu0
        %v549 = vadd.f32 %v381, %v548
        %v550 = vpop.f32.mrf.mxu0
        %551 = vmatprep.mubr.bf16.mxu0 0
        %552 = vmatmul.mubr.bf16.gmra.mxu0 %v420
        %v553 = vpop.f32.mrf.mxu0
        %v554 = vadd.f32 %v381, %v553
        %v555 = vpop.f32.mrf.mxu0
        %v556 = vpop.f32.mrf.mxu0
        %v557 = vadd.f32 %v381, %v556
        %v558 = vpop.f32.mrf.mxu0
        %559 = vmatprep.mubr.bf16.mxu0 0
        %560 = vmatmul.mubr.bf16.gmra.mxu0 %v421
        %v561 = vpop.f32.mrf.mxu0
        %v562 = vadd.f32 %v381, %v561
        %v563 = vpop.f32.mrf.mxu0
        %v564 = vpop.f32.mrf.mxu0
        %v565 = vadd.f32 %v381, %v564
        %v566 = vpop.f32.mrf.mxu0
        %567 = vmatprep.mubr.bf16.mxu0 0
        %568 = vmatmul.mubr.bf16.gmra.mxu0 %v422
        %v569 = vpop.f32.mrf.mxu0
        %v570 = vadd.f32 %v381, %v569
        %v571 = vpop.f32.mrf.mxu0
        %v572 = vpop.f32.mrf.mxu0
        %v573 = vadd.f32 %v381, %v572
        %v574 = vpop.f32.mrf.mxu0
        %575 = vdwg.mxu0
        %v576 = vtanh.pop %v514
        %v577 = vtanh.pop %v517
        %v578 = vtanh.pop %v522
        %v579 = vtanh.pop %v525
        %v580 = vtanh.pop %v530
        %v581 = vtanh.pop %v533
        %v582 = vtanh.pop %v538
        %v583 = vtanh.pop %v541
        %v584 = vtanh.pop %v546
        %v585 = vtanh.pop %v549
        %v586 = vtanh.pop %v554
        %v587 = vtanh.pop %v557
        %v588 = vtanh.pop %v562
        %v589 = vtanh.pop %v565
        %v590 = vtanh.pop %v570
        %v591 = vtanh.pop %v573
        %v592 = vpack.c.bf16 %v577, %v576
        %v593 = vpack.c.bf16 %v579, %v578
        %v594 = vpack.c.bf16 %v581, %v580
        %v595 = vpack.c.bf16 %v583, %v582
        %v596 = vpack.c.bf16 %v585, %v584
        %v597 = vpack.c.bf16 %v587, %v586
        %v598 = vpack.c.bf16 %v589, %v588
        %v599 = vpack.c.bf16 %v591, %v590
        %v608 = vunpack.c.l.b16 %v592
        %v609 = vunpack.c.h.b16 %v592
        %v610 = vunpack.c.l.b16 %v593
        %v611 = vunpack.c.h.b16 %v593
        %v612 = vunpack.c.l.b16 %v594
        %v613 = vunpack.c.h.b16 %v594
        %v614 = vunpack.c.l.b16 %v595
        %v615 = vunpack.c.h.b16 %v595
        %v616 = vunpack.c.l.b16 %v596
        %v617 = vunpack.c.h.b16 %v596
        %v618 = vunpack.c.l.b16 %v597
        %v619 = vunpack.c.h.b16 %v597
        %v620 = vunpack.c.l.b16 %v598
        %v621 = vunpack.c.h.b16 %v598
        %v622 = vunpack.c.l.b16 %v599
        %v623 = vunpack.c.h.b16 %v599
        %v624 = vpack.c.b16 %v608, %v608
        %v625 = vpack.c.b16 %v609, %v609
        %v626 = vpack.c.b16 %v610, %v610
        %v627 = vpack.c.b16 %v611, %v611
        %v628 = vpack.c.b16 %v612, %v612
        %v629 = vpack.c.b16 %v613, %v613
        %v630 = vpack.c.b16 %v614, %v614
        %v631 = vpack.c.b16 %v615, %v615
        %v632 = vpack.c.b16 %v616, %v616
        %v633 = vpack.c.b16 %v617, %v617
        %v634 = vpack.c.b16 %v618, %v618
        %v635 = vpack.c.b16 %v619, %v619
        %v636 = vpack.c.b16 %v620, %v620
        %v637 = vpack.c.b16 %v621, %v621
        %v638 = vpack.c.b16 %v622, %v622
        %v639 = vpack.c.b16 %v623, %v623
        %656 = vst [vmem:[#allocation2] sm:$0xf] %v624
        %657 = vst [vmem:[#allocation2 + $0x4] sm:$0xf] %v625
        %658 = vst [vmem:[#allocation2 + $0x8] sm:$0xf] %v626
        %659 = vst [vmem:[#allocation2 + $0xc] sm:$0xf] %v627
        %660 = vst [vmem:[#allocation2 + $0x10] sm:$0xf] %v628
        %661 = vst [vmem:[#allocation2 + $0x14] sm:$0xf] %v629
        %662 = vst [vmem:[#allocation2 + $0x18] sm:$0xf] %v630
        %663 = vst [vmem:[#allocation2 + $0x1c] sm:$0xf] %v631
        %664 = vst [vmem:[#allocation2 + $0x20] sm:$0xf] %v632
        %665 = vst [vmem:[#allocation2 + $0x24] sm:$0xf] %v633
        %666 = vst [vmem:[#allocation2 + $0x28] sm:$0xf] %v634
        %667 = vst [vmem:[#allocation2 + $0x2c] sm:$0xf] %v635
        %668 = vst [vmem:[#allocation2 + $0x30] sm:$0xf] %v636
        %669 = vst [vmem:[#allocation2 + $0x34] sm:$0xf] %v637
        %670 = vst [vmem:[#allocation2 + $0x38] sm:$0xf] %v638
        %671 = vst [vmem:[#allocation2 + $0x3c] sm:$0xf] %v639
        %v672 = vld [vmem:[#allocation2] sm:$0xf]
        %v673 = vld [vmem:[#allocation2 + $0x4] sm:$0xf]
        %v674 = vld [vmem:[#allocation2 + $0x8] sm:$0xf]
        %v675 = vld [vmem:[#allocation2 + $0xc] sm:$0xf]
        %v676 = vld [vmem:[#allocation2 + $0x10] sm:$0xf]
        %v677 = vld [vmem:[#allocation2 + $0x14] sm:$0xf]
        %v678 = vld [vmem:[#allocation2 + $0x18] sm:$0xf]
        %v679 = vld [vmem:[#allocation2 + $0x1c] sm:$0xf]
        %v680 = vld [vmem:[#allocation2 + $0x20] sm:$0xf]
        %v681 = vld [vmem:[#allocation2 + $0x24] sm:$0xf]
        %v682 = vld [vmem:[#allocation2 + $0x28] sm:$0xf]
        %v683 = vld [vmem:[#allocation2 + $0x2c] sm:$0xf]
        %v684 = vld [vmem:[#allocation2 + $0x30] sm:$0xf]
        %v685 = vld [vmem:[#allocation2 + $0x34] sm:$0xf]
        %v686 = vld [vmem:[#allocation2 + $0x38] sm:$0xf]
        %v687 = vld [vmem:[#allocation2 + $0x3c] sm:$0xf]
        %v688 = vld [vmem:[#allocation8] sm:$0xf]
        %v689 = vld [vmem:[#allocation8 + $0x4] sm:$0xf]
        %v690 = vld [vmem:[#allocation8 + $0x8] sm:$0xf]
        %v691 = vld [vmem:[#allocation8 + $0xc] sm:$0xf]
        %v692 = vld [vmem:[#allocation8 + $0x10] sm:$0xf]
        %v693 = vld [vmem:[#allocation8 + $0x14] sm:$0xf]
        %v694 = vld [vmem:[#allocation8 + $0x18] sm:$0xf]
        %v695 = vld [vmem:[#allocation8 + $0x1c] sm:$0xf]
        %v696 = vld [vmem:[#allocation8 + $0x20] sm:$0xf]
        %v697 = vld [vmem:[#allocation8 + $0x24] sm:$0xf]
        %v698 = vld [vmem:[#allocation8 + $0x28] sm:$0xf]
        %v699 = vld [vmem:[#allocation8 + $0x2c] sm:$0xf]
        %v700 = vld [vmem:[#allocation8 + $0x30] sm:$0xf]
        %v701 = vld [vmem:[#allocation8 + $0x34] sm:$0xf]
        %v702 = vld [vmem:[#allocation8 + $0x38] sm:$0xf]
        %v703 = vld [vmem:[#allocation8 + $0x3c] sm:$0xf]
        %v704 = vld [vmem:[%s4] sm:$0x1]
        %v706 = vlaneseq
        %v707 = vshrl.u32 %v706, 7
        %v708 = vsub.s32 0, %v707
        %v709 = vrot.slane %v704, %v708
        %v727 = vunpack.c.l.b16 %v672
        %v728 = vunpack.c.l.b16 %v673
        %v729 = vunpack.c.l.b16 %v674
        %v730 = vunpack.c.l.b16 %v675
        %v731 = vunpack.c.l.b16 %v676
        %v732 = vunpack.c.l.b16 %v677
        %v733 = vunpack.c.l.b16 %v678
        %v734 = vunpack.c.l.b16 %v679
        %v735 = vunpack.c.l.b16 %v680
        %v736 = vunpack.c.l.b16 %v681
        %v737 = vunpack.c.l.b16 %v682
        %v738 = vunpack.c.l.b16 %v683
        %v739 = vunpack.c.l.b16 %v684
        %v740 = vunpack.c.l.b16 %v685
        %v741 = vunpack.c.l.b16 %v686
        %v742 = vunpack.c.l.b16 %v687
        %v743 = vpack.c.b16 %v728, %v727
        %v744 = vpack.c.b16 %v730, %v729
        %v745 = vpack.c.b16 %v732, %v731
        %v746 = vpack.c.b16 %v734, %v733
        %v747 = vpack.c.b16 %v736, %v735
        %v748 = vpack.c.b16 %v738, %v737
        %v749 = vpack.c.b16 %v740, %v739
        %v750 = vpack.c.b16 %v742, %v741
        %v775 = vunpack.c.l.b16 %v688
        %v776 = vunpack.c.l.b16 %v689
        %v777 = vunpack.c.l.b16 %v690
        %v778 = vunpack.c.l.b16 %v691
        %v779 = vunpack.c.l.b16 %v692
        %v780 = vunpack.c.l.b16 %v693
        %v781 = vunpack.c.l.b16 %v694
        %v782 = vunpack.c.l.b16 %v695
        %v783 = vunpack.c.l.b16 %v696
        %v784 = vunpack.c.l.b16 %v697
        %v785 = vunpack.c.l.b16 %v698
        %v786 = vunpack.c.l.b16 %v699
        %v787 = vunpack.c.l.b16 %v700
        %v788 = vunpack.c.l.b16 %v701
        %v789 = vunpack.c.l.b16 %v702
        %v790 = vunpack.c.l.b16 %v703
        %v791 = vpack.c.b16 %v776, %v775
        %v792 = vpack.c.b16 %v778, %v777
        %v793 = vpack.c.b16 %v780, %v779
        %v794 = vpack.c.b16 %v782, %v781
        %v795 = vpack.c.b16 %v784, %v783
        %v796 = vpack.c.b16 %v786, %v785
        %v797 = vpack.c.b16 %v788, %v787
        %v798 = vpack.c.b16 %v790, %v789
        %807 = vmatprep.subr.bf16.mxu0 0
        %808 = vmatpush1.bf16.msra.mxu0 %v798
        %809 = vmatprep.subr.bf16.mxu0 0
        %810 = vmatpush1.bf16.msra.mxu0 %v797
        %811 = vmatprep.subr.bf16.mxu0 0
        %812 = vmatpush1.bf16.msra.mxu0 %v796
        %813 = vmatprep.subr.bf16.mxu0 0
        %814 = vmatpush1.bf16.msra.mxu0 %v795
        %815 = vmatprep.subr.bf16.mxu0 0
        %816 = vmatpush1.bf16.msra.mxu0 %v794
        %817 = vmatprep.subr.bf16.mxu0 0
        %818 = vmatpush1.bf16.msra.mxu0 %v793
        %819 = vmatprep.subr.bf16.mxu0 0
        %820 = vmatpush1.bf16.msra.mxu0 %v792
        %821 = vmatprep.subr.bf16.mxu0 0
        %822 = vmatpush1.bf16.msra.mxu0 %v791
        %823 = vmatprep.subr.bf16.mxu0 0
        %824 = vmatpush2.bf16.msra.mxu0 0
        %825 = vmatprep.subr.bf16.mxu0 0
        %826 = vmatpush2.bf16.msra.mxu0 0
        %827 = vmatprep.subr.bf16.mxu0 0
        %828 = vmatpush2.bf16.msra.mxu0 0
        %829 = vmatprep.subr.bf16.mxu0 0
        %830 = vmatpush2.bf16.msra.mxu0 0
        %831 = vmatprep.subr.bf16.mxu0 0
        %832 = vmatpush2.bf16.msra.mxu0 0
        %833 = vmatprep.subr.bf16.mxu0 0
        %834 = vmatpush2.bf16.msra.mxu0 0
        %835 = vmatprep.subr.bf16.mxu0 0
        %836 = vmatpush2.bf16.msra.mxu0 0
        %837 = vmatprep.subr.bf16.mxu0 0
        %838 = vmatpush2.bf16.msra.mxu0 0
        %839 = vmatprep.mubr.bf16.mxu0 0
        %840 = vmatmul.mubr.bf16.gmra.mxu0 %v743
        %v841 = vpop.f32.mrf.mxu0
        %v842 = vadd.f32 %v709, %v841
        %v843 = vpop.f32.mrf.mxu0
        %v844 = vpop.f32.mrf.mxu0
        %v845 = vadd.f32 %v709, %v844
        %v846 = vpop.f32.mrf.mxu0
        %847 = vmatprep.mubr.bf16.mxu0 0
        %848 = vmatmul.mubr.bf16.gmra.mxu0 %v744
        %v849 = vpop.f32.mrf.mxu0
        %v850 = vadd.f32 %v709, %v849
        %v851 = vpop.f32.mrf.mxu0
        %v852 = vpop.f32.mrf.mxu0
        %v853 = vadd.f32 %v709, %v852
        %v854 = vpop.f32.mrf.mxu0
        %855 = vmatprep.mubr.bf16.mxu0 0
        %856 = vmatmul.mubr.bf16.gmra.mxu0 %v745
        %v857 = vpop.f32.mrf.mxu0
        %v858 = vadd.f32 %v709, %v857
        %v859 = vpop.f32.mrf.mxu0
        %v860 = vpop.f32.mrf.mxu0
        %v861 = vadd.f32 %v709, %v860
        %v862 = vpop.f32.mrf.mxu0
        %863 = vmatprep.mubr.bf16.mxu0 0
        %864 = vmatmul.mubr.bf16.gmra.mxu0 %v746
        %v865 = vpop.f32.mrf.mxu0
        %v866 = vadd.f32 %v709, %v865
        %v867 = vpop.f32.mrf.mxu0
        %v868 = vpop.f32.mrf.mxu0
        %v869 = vadd.f32 %v709, %v868
        %v870 = vpop.f32.mrf.mxu0
        %871 = vmatprep.mubr.bf16.mxu0 0
        %872 = vmatmul.mubr.bf16.gmra.mxu0 %v747
        %v873 = vpop.f32.mrf.mxu0
        %v874 = vadd.f32 %v709, %v873
        %v875 = vpop.f32.mrf.mxu0
        %v876 = vpop.f32.mrf.mxu0
        %v877 = vadd.f32 %v709, %v876
        %v878 = vpop.f32.mrf.mxu0
        %879 = vmatprep.mubr.bf16.mxu0 0
        %880 = vmatmul.mubr.bf16.gmra.mxu0 %v748
        %v881 = vpop.f32.mrf.mxu0
        %v882 = vadd.f32 %v709, %v881
        %v883 = vpop.f32.mrf.mxu0
        %v884 = vpop.f32.mrf.mxu0
        %v885 = vadd.f32 %v709, %v884
        %v886 = vpop.f32.mrf.mxu0
        %887 = vmatprep.mubr.bf16.mxu0 0
        %888 = vmatmul.mubr.bf16.gmra.mxu0 %v749
        %v889 = vpop.f32.mrf.mxu0
        %v890 = vadd.f32 %v709, %v889
        %v891 = vpop.f32.mrf.mxu0
        %v892 = vpop.f32.mrf.mxu0
        %v893 = vadd.f32 %v709, %v892
        %v894 = vpop.f32.mrf.mxu0
        %895 = vmatprep.mubr.bf16.mxu0 0
        %896 = vmatmul.mubr.bf16.gmra.mxu0 %v750
        %v897 = vpop.f32.mrf.mxu0
        %v898 = vadd.f32 %v709, %v897
        %v899 = vpop.f32.mrf.mxu0
        %v900 = vpop.f32.mrf.mxu0
        %v901 = vadd.f32 %v709, %v900
        %v902 = vpop.f32.mrf.mxu0
        %903 = vdwg.mxu0
        %v904 = vmax.f32 %v842, 0.0
        %v905 = vmax.f32 %v845, 0.0
        %v906 = vmax.f32 %v850, 0.0
        %v907 = vmax.f32 %v853, 0.0
        %v908 = vmax.f32 %v858, 0.0
        %v909 = vmax.f32 %v861, 0.0
        %v910 = vmax.f32 %v866, 0.0
        %v911 = vmax.f32 %v869, 0.0
        %v912 = vmax.f32 %v874, 0.0
        %v913 = vmax.f32 %v877, 0.0
        %v914 = vmax.f32 %v882, 0.0
        %v915 = vmax.f32 %v885, 0.0
        %v916 = vmax.f32 %v890, 0.0
        %v917 = vmax.f32 %v893, 0.0
        %v918 = vmax.f32 %v898, 0.0
        %v919 = vmax.f32 %v901, 0.0
        %v920 = vpack.c.bf16 %v905, %v904
        %v921 = vpack.c.bf16 %v907, %v906
        %v922 = vpack.c.bf16 %v909, %v908
        %v923 = vpack.c.bf16 %v911, %v910
        %v924 = vpack.c.bf16 %v913, %v912
        %v925 = vpack.c.bf16 %v915, %v914
        %v926 = vpack.c.bf16 %v917, %v916
        %v927 = vpack.c.bf16 %v919, %v918
        %v936 = vunpack.c.l.b16 %v920
        %v937 = vunpack.c.h.b16 %v920
        %v938 = vunpack.c.l.b16 %v921
        %v939 = vunpack.c.h.b16 %v921
        %v940 = vunpack.c.l.b16 %v922
        %v941 = vunpack.c.h.b16 %v922
        %v942 = vunpack.c.l.b16 %v923
        %v943 = vunpack.c.h.b16 %v923
        %v944 = vunpack.c.l.b16 %v924
        %v945 = vunpack.c.h.b16 %v924
        %v946 = vunpack.c.l.b16 %v925
        %v947 = vunpack.c.h.b16 %v925
        %v948 = vunpack.c.l.b16 %v926
        %v949 = vunpack.c.h.b16 %v926
        %v950 = vunpack.c.l.b16 %v927
        %v951 = vunpack.c.h.b16 %v927
        %v952 = vpack.c.b16 %v936, %v936
        %v953 = vpack.c.b16 %v937, %v937
        %v954 = vpack.c.b16 %v938, %v938
        %v955 = vpack.c.b16 %v939, %v939
        %v956 = vpack.c.b16 %v940, %v940
        %v957 = vpack.c.b16 %v941, %v941
        %v958 = vpack.c.b16 %v942, %v942
        %v959 = vpack.c.b16 %v943, %v943
        %v960 = vpack.c.b16 %v944, %v944
        %v961 = vpack.c.b16 %v945, %v945
        %v962 = vpack.c.b16 %v946, %v946
        %v963 = vpack.c.b16 %v947, %v947
        %v964 = vpack.c.b16 %v948, %v948
        %v965 = vpack.c.b16 %v949, %v949
        %v966 = vpack.c.b16 %v950, %v950
        %v967 = vpack.c.b16 %v951, %v951
        %984 = vst [vmem:[#allocation2] sm:$0xf] %v952
        %985 = vst [vmem:[#allocation2 + $0x4] sm:$0xf] %v953
        %986 = vst [vmem:[#allocation2 + $0x8] sm:$0xf] %v954
        %987 = vst [vmem:[#allocation2 + $0xc] sm:$0xf] %v955
        %988 = vst [vmem:[#allocation2 + $0x10] sm:$0xf] %v956
        %989 = vst [vmem:[#allocation2 + $0x14] sm:$0xf] %v957
        %990 = vst [vmem:[#allocation2 + $0x18] sm:$0xf] %v958
        %991 = vst [vmem:[#allocation2 + $0x1c] sm:$0xf] %v959
        %992 = vst [vmem:[#allocation2 + $0x20] sm:$0xf] %v960
        %993 = vst [vmem:[#allocation2 + $0x24] sm:$0xf] %v961
        %994 = vst [vmem:[#allocation2 + $0x28] sm:$0xf] %v962
        %995 = vst [vmem:[#allocation2 + $0x2c] sm:$0xf] %v963
        %996 = vst [vmem:[#allocation2 + $0x30] sm:$0xf] %v964
        %997 = vst [vmem:[#allocation2 + $0x34] sm:$0xf] %v965
        %998 = vst [vmem:[#allocation2 + $0x38] sm:$0xf] %v966
        %999 = vst [vmem:[#allocation2 + $0x3c] sm:$0xf] %v967
        %v1000 = vld [vmem:[#allocation2] sm:$0xf]
        %v1001 = vld [vmem:[#allocation2 + $0x4] sm:$0xf]
        %v1002 = vld [vmem:[#allocation2 + $0x8] sm:$0xf]
        %v1003 = vld [vmem:[#allocation2 + $0xc] sm:$0xf]
        %v1004 = vld [vmem:[#allocation2 + $0x10] sm:$0xf]
        %v1005 = vld [vmem:[#allocation2 + $0x14] sm:$0xf]
        %v1006 = vld [vmem:[#allocation2 + $0x18] sm:$0xf]
        %v1007 = vld [vmem:[#allocation2 + $0x1c] sm:$0xf]
        %v1008 = vld [vmem:[#allocation2 + $0x20] sm:$0xf]
        %v1009 = vld [vmem:[#allocation2 + $0x24] sm:$0xf]
        %v1010 = vld [vmem:[#allocation2 + $0x28] sm:$0xf]
        %v1011 = vld [vmem:[#allocation2 + $0x2c] sm:$0xf]
        %v1012 = vld [vmem:[#allocation2 + $0x30] sm:$0xf]
        %v1013 = vld [vmem:[#allocation2 + $0x34] sm:$0xf]
        %v1014 = vld [vmem:[#allocation2 + $0x38] sm:$0xf]
        %v1015 = vld [vmem:[#allocation2 + $0x3c] sm:$0xf]
        %v1016 = vld [vmem:[#allocation9] sm:$0xf]
        %v1017 = vld [vmem:[#allocation9 + $0x4] sm:$0xf]
        %v1018 = vld [vmem:[#allocation9 + $0x8] sm:$0xf]
        %v1019 = vld [vmem:[#allocation9 + $0xc] sm:$0xf]
        %v1020 = vld [vmem:[#allocation9 + $0x10] sm:$0xf]
        %v1021 = vld [vmem:[#allocation9 + $0x14] sm:$0xf]
        %v1022 = vld [vmem:[#allocation9 + $0x18] sm:$0xf]
        %v1023 = vld [vmem:[#allocation9 + $0x1c] sm:$0xf]
        %v1024 = vld [vmem:[#allocation9 + $0x20] sm:$0xf]
        %v1025 = vld [vmem:[#allocation9 + $0x24] sm:$0xf]
        %v1026 = vld [vmem:[#allocation9 + $0x28] sm:$0xf]
        %v1027 = vld [vmem:[#allocation9 + $0x2c] sm:$0xf]
        %v1028 = vld [vmem:[#allocation9 + $0x30] sm:$0xf]
        %v1029 = vld [vmem:[#allocation9 + $0x34] sm:$0xf]
        %v1030 = vld [vmem:[#allocation9 + $0x38] sm:$0xf]
        %v1031 = vld [vmem:[#allocation9 + $0x3c] sm:$0xf]
        %v1032 = vld [vmem:[%s6] sm:$0x1]
        %v1034 = vlaneseq
        %v1035 = vshrl.u32 %v1034, 7
        %v1036 = vsub.s32 0, %v1035
        %v1037 = vrot.slane %v1032, %v1036
        %v1055 = vunpack.c.l.b16 %v1000
        %v1056 = vunpack.c.l.b16 %v1001
        %v1057 = vunpack.c.l.b16 %v1002
        %v1058 = vunpack.c.l.b16 %v1003
        %v1059 = vunpack.c.l.b16 %v1004
        %v1060 = vunpack.c.l.b16 %v1005
        %v1061 = vunpack.c.l.b16 %v1006
        %v1062 = vunpack.c.l.b16 %v1007
        %v1063 = vunpack.c.l.b16 %v1008
        %v1064 = vunpack.c.l.b16 %v1009
        %v1065 = vunpack.c.l.b16 %v1010
        %v1066 = vunpack.c.l.b16 %v1011
        %v1067 = vunpack.c.l.b16 %v1012
        %v1068 = vunpack.c.l.b16 %v1013
        %v1069 = vunpack.c.l.b16 %v1014
        %v1070 = vunpack.c.l.b16 %v1015
        %v1071 = vpack.c.b16 %v1056, %v1055
        %v1072 = vpack.c.b16 %v1058, %v1057
        %v1073 = vpack.c.b16 %v1060, %v1059
        %v1074 = vpack.c.b16 %v1062, %v1061
        %v1075 = vpack.c.b16 %v1064, %v1063
        %v1076 = vpack.c.b16 %v1066, %v1065
        %v1077 = vpack.c.b16 %v1068, %v1067
        %v1078 = vpack.c.b16 %v1070, %v1069
        %v1103 = vunpack.c.l.b16 %v1016
        %v1104 = vunpack.c.l.b16 %v1017
        %v1105 = vunpack.c.l.b16 %v1018
        %v1106 = vunpack.c.l.b16 %v1019
        %v1107 = vunpack.c.l.b16 %v1020
        %v1108 = vunpack.c.l.b16 %v1021
        %v1109 = vunpack.c.l.b16 %v1022
        %v1110 = vunpack.c.l.b16 %v1023
        %v1111 = vunpack.c.l.b16 %v1024
        %v1112 = vunpack.c.l.b16 %v1025
        %v1113 = vunpack.c.l.b16 %v1026
        %v1114 = vunpack.c.l.b16 %v1027
        %v1115 = vunpack.c.l.b16 %v1028
        %v1116 = vunpack.c.l.b16 %v1029
        %v1117 = vunpack.c.l.b16 %v1030
        %v1118 = vunpack.c.l.b16 %v1031
        %v1119 = vpack.c.b16 %v1104, %v1103
        %v1120 = vpack.c.b16 %v1106, %v1105
        %v1121 = vpack.c.b16 %v1108, %v1107
        %v1122 = vpack.c.b16 %v1110, %v1109
        %v1123 = vpack.c.b16 %v1112, %v1111
        %v1124 = vpack.c.b16 %v1114, %v1113
        %v1125 = vpack.c.b16 %v1116, %v1115
        %v1126 = vpack.c.b16 %v1118, %v1117
        %1135 = vmatprep.subr.bf16.mxu0 0
        %1136 = vmatpush1.bf16.msra.mxu0 %v1126
        %1137 = vmatprep.subr.bf16.mxu0 0
        %1138 = vmatpush1.bf16.msra.mxu0 %v1125
        %1139 = vmatprep.subr.bf16.mxu0 0
        %1140 = vmatpush1.bf16.msra.mxu0 %v1124
        %1141 = vmatprep.subr.bf16.mxu0 0
        %1142 = vmatpush1.bf16.msra.mxu0 %v1123
        %1143 = vmatprep.subr.bf16.mxu0 0
        %1144 = vmatpush1.bf16.msra.mxu0 %v1122
        %1145 = vmatprep.subr.bf16.mxu0 0
        %1146 = vmatpush1.bf16.msra.mxu0 %v1121
        %1147 = vmatprep.subr.bf16.mxu0 0
        %1148 = vmatpush1.bf16.msra.mxu0 %v1120
        %1149 = vmatprep.subr.bf16.mxu0 0
        %1150 = vmatpush1.bf16.msra.mxu0 %v1119
        %1151 = vmatprep.subr.bf16.mxu0 0
        %1152 = vmatpush2.bf16.msra.mxu0 0
        %1153 = vmatprep.subr.bf16.mxu0 0
        %1154 = vmatpush2.bf16.msra.mxu0 0
        %1155 = vmatprep.subr.bf16.mxu0 0
        %1156 = vmatpush2.bf16.msra.mxu0 0
        %1157 = vmatprep.subr.bf16.mxu0 0
        %1158 = vmatpush2.bf16.msra.mxu0 0
        %1159 = vmatprep.subr.bf16.mxu0 0
        %1160 = vmatpush2.bf16.msra.mxu0 0
        %1161 = vmatprep.subr.bf16.mxu0 0
        %1162 = vmatpush2.bf16.msra.mxu0 0
        %1163 = vmatprep.subr.bf16.mxu0 0
        %1164 = vmatpush2.bf16.msra.mxu0 0
        %1165 = vmatprep.subr.bf16.mxu0 0
        %1166 = vmatpush2.bf16.msra.mxu0 0
        %1167 = vmatprep.mubr.bf16.mxu0 0
        %1168 = vmatmul.mubr.bf16.gmra.mxu0 %v1071
        %v1169 = vpop.f32.mrf.mxu0
        %v1170 = vadd.f32 %v1037, %v1169
        %v1171 = vpop.f32.mrf.mxu0
        %v1172 = vpop.f32.mrf.mxu0
        %v1173 = vadd.f32 %v1037, %v1172
        %v1174 = vpop.f32.mrf.mxu0
        %1175 = vmatprep.mubr.bf16.mxu0 0
        %1176 = vmatmul.mubr.bf16.gmra.mxu0 %v1072
        %v1177 = vpop.f32.mrf.mxu0
        %v1178 = vadd.f32 %v1037, %v1177
        %v1179 = vpop.f32.mrf.mxu0
        %v1180 = vpop.f32.mrf.mxu0
        %v1181 = vadd.f32 %v1037, %v1180
        %v1182 = vpop.f32.mrf.mxu0
        %1183 = vmatprep.mubr.bf16.mxu0 0
        %1184 = vmatmul.mubr.bf16.gmra.mxu0 %v1073
        %v1185 = vpop.f32.mrf.mxu0
        %v1186 = vadd.f32 %v1037, %v1185
        %v1187 = vpop.f32.mrf.mxu0
        %v1188 = vpop.f32.mrf.mxu0
        %v1189 = vadd.f32 %v1037, %v1188
        %v1190 = vpop.f32.mrf.mxu0
        %1191 = vmatprep.mubr.bf16.mxu0 0
        %1192 = vmatmul.mubr.bf16.gmra.mxu0 %v1074
        %v1193 = vpop.f32.mrf.mxu0
        %v1194 = vadd.f32 %v1037, %v1193
        %v1195 = vpop.f32.mrf.mxu0
        %v1196 = vpop.f32.mrf.mxu0
        %v1197 = vadd.f32 %v1037, %v1196
        %v1198 = vpop.f32.mrf.mxu0
        %1199 = vmatprep.mubr.bf16.mxu0 0
        %1200 = vmatmul.mubr.bf16.gmra.mxu0 %v1075
        %v1201 = vpop.f32.mrf.mxu0
        %v1202 = vadd.f32 %v1037, %v1201
        %v1203 = vpop.f32.mrf.mxu0
        %v1204 = vpop.f32.mrf.mxu0
        %v1205 = vadd.f32 %v1037, %v1204
        %v1206 = vpop.f32.mrf.mxu0
        %1207 = vmatprep.mubr.bf16.mxu0 0
        %1208 = vmatmul.mubr.bf16.gmra.mxu0 %v1076
        %v1209 = vpop.f32.mrf.mxu0
        %v1210 = vadd.f32 %v1037, %v1209
        %v1211 = vpop.f32.mrf.mxu0
        %v1212 = vpop.f32.mrf.mxu0
        %v1213 = vadd.f32 %v1037, %v1212
        %v1214 = vpop.f32.mrf.mxu0
        %1215 = vmatprep.mubr.bf16.mxu0 0
        %1216 = vmatmul.mubr.bf16.gmra.mxu0 %v1077
        %v1217 = vpop.f32.mrf.mxu0
        %v1218 = vadd.f32 %v1037, %v1217
        %v1219 = vpop.f32.mrf.mxu0
        %v1220 = vpop.f32.mrf.mxu0
        %v1221 = vadd.f32 %v1037, %v1220
        %v1222 = vpop.f32.mrf.mxu0
        %1223 = vmatprep.mubr.bf16.mxu0 0
        %1224 = vmatmul.mubr.bf16.gmra.mxu0 %v1078
        %v1225 = vpop.f32.mrf.mxu0
        %v1226 = vadd.f32 %v1037, %v1225
        %v1227 = vpop.f32.mrf.mxu0
        %v1228 = vpop.f32.mrf.mxu0
        %v1229 = vadd.f32 %v1037, %v1228
        %v1230 = vpop.f32.mrf.mxu0
        %1231 = vdwg.mxu0
        %1232 = vst [vmem:[%s340] sm:$0xff] %v1170
        %1233 = vst [vmem:[%s340 + $0x8] sm:$0xff] %v1173
        %1234 = vst [vmem:[%s340 + $0x10] sm:$0xff] %v1178
        %1235 = vst [vmem:[%s340 + $0x18] sm:$0xff] %v1181
        %1236 = vst [vmem:[%s340 + $0x20] sm:$0xff] %v1186
        %1237 = vst [vmem:[%s340 + $0x28] sm:$0xff] %v1189
        %1238 = vst [vmem:[%s340 + $0x30] sm:$0xff] %v1194
        %1239 = vst [vmem:[%s340 + $0x38] sm:$0xff] %v1197
        %1240 = vst [vmem:[%s340 + $0x40] sm:$0xff] %v1202
        %1241 = vst [vmem:[%s340 + $0x48] sm:$0xff] %v1205
        %1242 = vst [vmem:[%s340 + $0x50] sm:$0xff] %v1210
        %1243 = vst [vmem:[%s340 + $0x58] sm:$0xff] %v1213
        %1244 = vst [vmem:[%s340 + $0x60] sm:$0xff] %v1218
        %1245 = vst [vmem:[%s340 + $0x68] sm:$0xff] %v1221
        %1246 = vst [vmem:[%s340 + $0x70] sm:$0xff] %v1226
        %1247 = vst [vmem:[%s340 + $0x78] sm:$0xff] %v1229
        %s1248 = sand.u32 %s186, 1
        %s1249 = scalar_lea.sflag [#allocation5], %s1248
        %s1250 = sand.u32 %s186, 1
        %s1251 = smul.addr %s1250, 128
        %s1252 = scalar_lea.vmem [#allocation11], %s1251
        // Predicated region
        $region65: #{tpu_custom_call.1} parent=47 // pred_check
          %p1253 = pneg %p196
        $region66: #{tpu_custom_call.1} parent=47 // pred_check_branch
          %1255 = sbr.rel (%p1253) target = $region68
        $region67: #{tpu_custom_call.1} parent=47 // pred_region
          %s1256 = smul.u32 16, %s26
          %s1258 = ssub.s32 2048, 2048
          %1259 = vsyncadd %s1249, %s1258
          %s1260 = smul.addr %s1256, 128
          %s1261 = scalar_lea.hbm %s7, %s1260
          %s1262 = sshll.u32 %s1252, 4
          %s1263 = int_to_ptr.vmem [resolvable:$true] %s1262
          %1268 = dma.vmem_to_hbm [thread:$0]  %s1263, 2048, %s1261, %s1249, 128, 128, 8
        $region68: #{tpu_custom_call.1} parent=47 // pred_fallthru
          _
      $region48: #{tpu_custom_call.1} parent=5 // pred_fallthru
        _
      %p1269 = scmp.le.s32.totalorder 2, %s21
      // Predicated region
      $region69: #{tpu_custom_call.1} parent=5 // pred_check
        %p1270 = pneg %p1269
      $region70: #{tpu_custom_call.1} parent=5 // pred_check_branch
        %1272 = sbr.rel (%p1270) target = $region72
      $region71: #{tpu_custom_call.1} parent=5 // pred_region
        %s1273 = ssub.s32 %s21, 2
        // Predicated region
        $region73: #{tpu_custom_call.1} parent=71 // pred_check
          %p1274 = pneg %p202
        $region74: #{tpu_custom_call.1} parent=71 // pred_check_branch
          %1276 = sbr.rel (%p1274) target = $region76
        $region75: #{tpu_custom_call.1} parent=71 // pred_region
          %s1277 = sand.u32 %s187, 1
          %s1278 = scalar_lea.sflag [#allocation5], %s1277
          %s1279 = sand.u32 %s187, 1
          %s1280 = smul.addr %s1279, 128
          %s1281 = scalar_lea.vmem [#allocation11], %s1280
          %1282 = dma.done %s1278, 2048
        $region76: #{tpu_custom_call.1} parent=71 // pred_fallthru
          _
      $region72: #{tpu_custom_call.1} parent=5 // pred_fallthru
        _
    $region6: #{tpu_custom_call.1} parent=1 // loop_footer
      %s25 = sadd.s32 1, %s21
    $region7: #{tpu_custom_call.1} parent=1 // loop_footer_branch
      %20 = sbr.rel target = $region3
    $region8: #{tpu_custom_call.1} parent=1 // loop_exit
      _
    %1283 = vsyncpa [#allocation4], 1
    %s1284 = scalar_lea.sflag [#allocation4], 1
    %1285 = vsyncpa %s1284, 1
    %1286 = vsyncpa [#allocation7], 1
    %1287 = vsyncpa [#allocation10], 1
    %1288 = vsyncpa [#allocation5], 1
    %s1289 = scalar_lea.sflag [#allocation5], 1
    %1290 = vsyncpa %s1289, 1

</llo_original>
